<compile_context>
chip_gen: v5e
topology: v5e:2x2
jax: 0.10.0
libtpu: 0.0.40
codegen_flags: <defaults>
</compile_context>

<pallas_src>
import functools

import jax
import jax.numpy as jnp
from jax import lax
from jax.experimental import pallas as pl
from jax.experimental.pallas import tpu as pltpu


# ---------------------------------------------------------------------------
# Fused Pallas kernel: one grid step == one batch element
# ---------------------------------------------------------------------------
def _dot_nt(a, b):
    """a:(M,K) x b:(P,K) -> (M,P); contracts last dims of both operands.

    Avoids materializing b.T (no XLU transpose / VMEM relayout per step).
    """
    return lax.dot_general(
        a,
        b,
        dimension_numbers=(((1,), (1,)), ((), ())),
        preferred_element_type=jnp.float32,
    )


def _fused_attention_kernel(
    tgt_ref,   # (1, M, C)   target (query) activations
    ref_ref,   # (1, N, C)   reference (key/value) activations
    qw_ref,    # (C, C)      q weight, PyTorch nn.Linear layout (out, in)
    qb_ref,    # (1, C)      q bias
    kvw_ref,   # (2C, C)     kv weight
    kvb_ref,   # (1, 2C)     kv bias
    pw_ref,    # (C, C)      proj weight
    pb_ref,    # (1, C)      proj bias
    o_ref,     # (1, M, C)   output
    *,
    num_heads,
    head_dim,
    scale,
):
    C = num_heads * head_dim
    tgt = tgt_ref[0]   # (M, C)
    ref = ref_ref[0]   # (N, C)

    # Projections: y = x @ W.T + b  (f32 accumulation on the MXU).
    q_all = _dot_nt(tgt, qw_ref[...]) + qb_ref[...]     # (M, C)
    kv_all = _dot_nt(ref, kvw_ref[...]) + kvb_ref[...]  # (N, 2C)
    # kv layout matches reshape(B, N, 2, H, D): cols [0, C) are k (per-head
    # contiguous D-wide slices), cols [C, 2C) are v.

    head_outs = []
    for h in range(num_heads):  # H is tiny (4) -> fully unrolled
        lo = h * head_dim
        q_h = q_all[:, lo:lo + head_dim]            # (M, D)
        k_h = kv_all[:, lo:lo + head_dim]           # (N, D)
        v_h = kv_all[:, C + lo:C + lo + head_dim]   # (N, D)

        s = _dot_nt(q_h, k_h) * scale               # (M, N) scores
        m = jnp.max(s, axis=-1, keepdims=True)
        p = jnp.exp(s - m)
        denom = jnp.sum(p, axis=-1, keepdims=True)
        o_h = jnp.dot(p, v_h, preferred_element_type=jnp.float32)   # (M, D)
        # Divide -> EUP reciprocal + VPU multiply (EUP slot is otherwise idle
        # after the exp).
        o_h = o_h * pl.reciprocal(denom, approx=True)
        head_outs.append(o_h)

    x = jnp.concatenate(head_outs, axis=-1)          # (M, C) lane-dense

    # Output projection (proj_drop p=0.0 -> identity).
    y = _dot_nt(x, pw_ref[...]) + pb_ref[...]        # (M, C)
    o_ref[0] = y.astype(o_ref.dtype)


# ---------------------------------------------------------------------------
# Module forward: a single pallas_call
# ---------------------------------------------------------------------------
def attention_forward(target, reference, params, num_heads):
    if reference is None:
        reference = target
    # TODO(synk): masked attention path (attn_mask fill) not implemented.
    # TODO(synk): linear-attention branch (self.linear=True) not implemented.
    assert reference["masks"] is None and target["masks"] is None

    ref_data = reference["data"]
    tgt_data = target["data"]
    B, N, C = ref_data.shape
    Bq, M, _ = tgt_data.shape
    head_dim = C // num_heads
    scale = head_dim ** (-0.5)

    # Mirrors `if q.shape[0] == 1: q = q.repeat(B, 1, 1)` with zero HBM cost:
    # when Bq == 1, every batch grid step just re-reads the same q tile.
    if Bq == 1:
        q_index_map = lambda b: (0, 0, 0)
    else:
        assert Bq == B
        q_index_map = lambda b: (b, 0, 0)

    kernel = functools.partial(
        _fused_attention_kernel,
        num_heads=num_heads,
        head_dim=head_dim,
        scale=scale,
    )

    return pl.pallas_call(
        kernel,
        out_shape=jax.ShapeDtypeStruct((B, M, C), tgt_data.dtype),
        grid=(B,),
        in_specs=[
            pl.BlockSpec((1, M, C), q_index_map),            # target
            pl.BlockSpec((1, N, C), lambda b: (b, 0, 0)),     # reference
            pl.BlockSpec((C, C), lambda b: (0, 0)),           # q_w
            pl.BlockSpec((1, C), lambda b: (0, 0)),           # q_b
            pl.BlockSpec((2 * C, C), lambda b: (0, 0)),       # kv_w
            pl.BlockSpec((1, 2 * C), lambda b: (0, 0)),       # kv_b
            pl.BlockSpec((C, C), lambda b: (0, 0)),           # proj_w
            pl.BlockSpec((1, C), lambda b: (0, 0)),           # proj_b
        ],
        out_specs=pl.BlockSpec((1, M, C), lambda b: (b, 0, 0)),
        compiler_params=pltpu.CompilerParams(
            dimension_semantics=("parallel",),
        ),
    )(
        tgt_data,
        ref_data,
        params["q_w"],
        params["q_b"].reshape(1, C),
        params["kv_w"],
        params["kv_b"].reshape(1, 2 * C),
        params["proj_w"],
        params["proj_b"].reshape(1, C),
    )


# ---------------------------------------------------------------------------
# Pure-JAX reference for verification
# ---------------------------------------------------------------------------
def attention_reference(target, reference, params, num_heads):
    ref_data = reference["data"]
    tgt_data = target["data"]
    B, N, C = ref_data.shape
    Bq, M, _ = tgt_data.shape
    D = C // num_heads
    scale = D ** (-0.5)

    kv = ref_data @ params["kv_w"].T + params["kv_b"]
    kv = kv.reshape(B, N, 2, num_heads, D).transpose(2, 0, 3, 1, 4)
    k, v = kv[0], kv[1]
    q = tgt_data @ params["q_w"].T + params["q_b"]
    if q.shape[0] == 1:
        q = jnp.broadcast_to(q, (B, M, C))
    q = q.reshape(B, M, num_heads, D).transpose(0, 2, 1, 3)

    attn = jnp.einsum("bhmd,bhnd->bhmn", q, k) * scale
    attn = jax.nn.softmax(attn, axis=-1)
    x = jnp.einsum("bhmn,bhnd->bhmd", attn, v)
    x = x.transpose(0, 2, 1, 3).reshape(B, M, C)
    x = x @ params["proj_w"].T + params["proj_b"]
    return x


# ---------------------------------------------------------------------------
# Main
# ---------------------------------------------------------------------------
if __name__ == "__main__":
    # Module config: dim=32, num_heads=4, qkv_bias=False, linear=False
    dim = 32
    num_heads = 4
    B, N, M = 2, 16, 8  # batch, reference (kv) length, target (q) length

    key = jax.random.PRNGKey(0)
    k_q, k_kv, k_proj, k_pb, k_t, k_r, k_t1 = jax.random.split(key, 7)

    params = {
        "q_w": 0.1 * jax.random.normal(k_q, (dim, dim), jnp.float32),
        "q_b": jnp.zeros((dim,), jnp.float32),          # qkv_bias=False
        "kv_w": 0.1 * jax.random.normal(k_kv, (2 * dim, dim), jnp.float32),
        "kv_b": jnp.zeros((2 * dim,), jnp.float32),     # qkv_bias=False
        "proj_w": 0.1 * jax.random.normal(k_proj, (dim, dim), jnp.float32),
        "proj_b": 0.1 * jax.random.normal(k_pb, (dim,), jnp.float32),
    }

    reference = {
        "data": jax.random.normal(k_r, (B, N, dim), jnp.float32),
        "masks": None,
    }

    # Case 1: per-batch queries (Bq == B).
    target = {
        "data": jax.random.normal(k_t, (B, M, dim), jnp.float32),
        "masks": None,
    }
    out = jax.block_until_ready(attention_forward(target, reference, params, num_heads))
    ref_out = attention_reference(target, reference, params, num_heads)
    assert out.shape == (B, M, dim)
    # Tolerance is slightly relaxed vs. exact math because of the EUP
    # approximate reciprocal used in the softmax normalization.
    assert jnp.allclose(out, ref_out, rtol=1e-3, atol=1e-3), "mismatch vs reference"

    # Case 2: shared query (Bq == 1 -> broadcast across batch via index_map).
    target1 = {
        "data": jax.random.normal(k_t1, (1, M, dim), jnp.float32),
        "masks": None,
    }
    out1 = jax.block_until_ready(attention_forward(target1, reference, params, num_heads))
    ref_out1 = attention_reference(target1, reference, params, num_heads)
    assert out1.shape == (B, M, dim)
    assert jnp.allclose(out1, ref_out1, rtol=1e-3, atol=1e-3), "mismatch vs reference (Bq=1)"

    print("KERNEL_OK")
</pallas_src>

<mosaic_0001>
module attributes {stable_mosaic.version = 11 : i64} {
  func.func @_fused_attention_kernel(%arg0: i32, %arg1: memref<1x8x32xf32, #tpu.memory_space<vmem>>, %arg2: memref<1x16x32xf32, #tpu.memory_space<vmem>>, %arg3: memref<32x32xf32, #tpu.memory_space<vmem>>, %arg4: memref<1x32xf32, #tpu.memory_space<vmem>>, %arg5: memref<64x32xf32, #tpu.memory_space<vmem>>, %arg6: memref<1x64xf32, #tpu.memory_space<vmem>>, %arg7: memref<32x32xf32, #tpu.memory_space<vmem>>, %arg8: memref<1x32xf32, #tpu.memory_space<vmem>>, %arg9: memref<1x8x32xf32, #tpu.memory_space<vmem>>) attributes {dimension_semantics = [#tpu.dimension_semantics<parallel>], iteration_bounds = array<i64: 2>, scalar_prefetch = 0 : i64, scratch_operands = 0 : i64, tpu.core_type = #tpu.core_type<tc>, window_params = [{transform_indices = @transform_0, window_bounds = array<i64: 1, 8, 32>}, {transform_indices = @transform_1, window_bounds = array<i64: 1, 16, 32>}, {pipeline_mode = #tpu.pipeline_mode<synchronous>, transform_indices = @transform_2, window_bounds = array<i64: 32, 32>}, {pipeline_mode = #tpu.pipeline_mode<synchronous>, transform_indices = @transform_3, window_bounds = array<i64: 1, 32>}, {pipeline_mode = #tpu.pipeline_mode<synchronous>, transform_indices = @transform_4, window_bounds = array<i64: 64, 32>}, {pipeline_mode = #tpu.pipeline_mode<synchronous>, transform_indices = @transform_5, window_bounds = array<i64: 1, 64>}, {pipeline_mode = #tpu.pipeline_mode<synchronous>, transform_indices = @transform_6, window_bounds = array<i64: 32, 32>}, {pipeline_mode = #tpu.pipeline_mode<synchronous>, transform_indices = @transform_7, window_bounds = array<i64: 1, 32>}, {transform_indices = @transform_8, window_bounds = array<i64: 1, 8, 32>}]} {
    %c0 = arith.constant 0 : index
    %c0_0 = arith.constant 0 : index
    %c0_1 = arith.constant 0 : index
    %0 = vector.load %arg1[%c0, %c0_0, %c0_1] : memref<1x8x32xf32, #tpu.memory_space<vmem>>, vector<1x8x32xf32>
    %1 = vector.shape_cast %0 : vector<1x8x32xf32> to vector<8x32xf32>
    %c0_2 = arith.constant 0 : index
    %c0_3 = arith.constant 0 : index
    %c0_4 = arith.constant 0 : index
    %2 = vector.load %arg2[%c0_2, %c0_3, %c0_4] : memref<1x16x32xf32, #tpu.memory_space<vmem>>, vector<1x16x32xf32>
    %3 = vector.shape_cast %2 : vector<1x16x32xf32> to vector<16x32xf32>
    %c0_5 = arith.constant 0 : index
    %c0_6 = arith.constant 0 : index
    %4 = vector.load %arg3[%c0_5, %c0_6] : memref<32x32xf32, #tpu.memory_space<vmem>>, vector<32x32xf32>
    %cst = arith.constant dense<0.000000e+00> : vector<8x32xf32>
    %5 = tpu.matmul %1, %4, %cst {dimension_numbers = #tpu.dot_dimension_numbers<[1], [1], [0], [0], [0, 0, 1, 0], [], []>} : vector<8x32xf32>, vector<32x32xf32>, vector<8x32xf32> -> vector<8x32xf32>
    %c0_7 = arith.constant 0 : index
    %c0_8 = arith.constant 0 : index
    %6 = vector.load %arg4[%c0_7, %c0_8] : memref<1x32xf32, #tpu.memory_space<vmem>>, vector<1x32xf32>
    %7 = vector.broadcast %6 : vector<1x32xf32> to vector<8x32xf32>
    %8 = arith.addf %5, %7 : vector<8x32xf32>
    %c0_9 = arith.constant 0 : index
    %c0_10 = arith.constant 0 : index
    %9 = vector.load %arg5[%c0_9, %c0_10] : memref<64x32xf32, #tpu.memory_space<vmem>>, vector<64x32xf32>
    %cst_11 = arith.constant dense<0.000000e+00> : vector<16x64xf32>
    %10 = tpu.matmul %3, %9, %cst_11 {dimension_numbers = #tpu.dot_dimension_numbers<[1], [1], [0], [0], [0, 0, 1, 0], [], []>} : vector<16x32xf32>, vector<64x32xf32>, vector<16x64xf32> -> vector<16x64xf32>
    %c0_12 = arith.constant 0 : index
    %c0_13 = arith.constant 0 : index
    %11 = vector.load %arg6[%c0_12, %c0_13] : memref<1x64xf32, #tpu.memory_space<vmem>>, vector<1x64xf32>
    %12 = vector.broadcast %11 : vector<1x64xf32> to vector<16x64xf32>
    %13 = arith.addf %10, %12 : vector<16x64xf32>
    %14 = vector.extract_strided_slice %8 {offsets = [0, 0], sizes = [8, 8], strides = [1, 1]} : vector<8x32xf32> to vector<8x8xf32>
    %15 = vector.extract_strided_slice %13 {offsets = [0, 0], sizes = [16, 8], strides = [1, 1]} : vector<16x64xf32> to vector<16x8xf32>
    %16 = vector.extract_strided_slice %13 {offsets = [0, 32], sizes = [16, 8], strides = [1, 1]} : vector<16x64xf32> to vector<16x8xf32>
    %cst_14 = arith.constant dense<0.000000e+00> : vector<8x16xf32>
    %17 = tpu.matmul %14, %15, %cst_14 {dimension_numbers = #tpu.dot_dimension_numbers<[1], [1], [0], [0], [0, 0, 1, 0], [], []>} : vector<8x8xf32>, vector<16x8xf32>, vector<8x16xf32> -> vector<8x16xf32>
    %cst_15 = arith.constant 0.353553385 : f32
    %18 = vector.broadcast %cst_15 : f32 to vector<8x16xf32>
    %19 = arith.mulf %17, %18 : vector<8x16xf32>
    %cst_16 = arith.constant dense<0xFF800000> : vector<8xf32>
    %20 = vector.multi_reduction <maximumf>, %19, %cst_16 [1] : vector<8x16xf32> to vector<8xf32>
    %21 = vector.shape_cast %20 : vector<8xf32> to vector<8x1xf32>
    %22 = vector.broadcast %21 : vector<8x1xf32> to vector<8x16xf32>
    %23 = arith.subf %19, %22 : vector<8x16xf32>
    %24 = math.exp %23 : vector<8x16xf32>
    %cst_17 = arith.constant dense<0.000000e+00> : vector<8xf32>
    %25 = vector.multi_reduction <add>, %24, %cst_17 [1] : vector<8x16xf32> to vector<8xf32>
    %26 = vector.shape_cast %25 : vector<8xf32> to vector<8x1xf32>
    %cst_18 = arith.constant dense<0.000000e+00> : vector<8x8xf32>
    %27 = tpu.matmul %24, %16, %cst_18 {dimension_numbers = #tpu.dot_dimension_numbers<[1], [0], [0], [1], [0, 0, 1, 1], [], []>} : vector<8x16xf32>, vector<16x8xf32>, vector<8x8xf32> -> vector<8x8xf32>
    %28 = tpu.reciprocal %26 {approx = true} : vector<8x1xf32> -> vector<8x1xf32>
    %29 = vector.broadcast %28 : vector<8x1xf32> to vector<8x8xf32>
    %30 = arith.mulf %27, %29 : vector<8x8xf32>
    %31 = vector.extract_strided_slice %8 {offsets = [0, 8], sizes = [8, 8], strides = [1, 1]} : vector<8x32xf32> to vector<8x8xf32>
    %32 = vector.extract_strided_slice %13 {offsets = [0, 8], sizes = [16, 8], strides = [1, 1]} : vector<16x64xf32> to vector<16x8xf32>
    %33 = vector.extract_strided_slice %13 {offsets = [0, 40], sizes = [16, 8], strides = [1, 1]} : vector<16x64xf32> to vector<16x8xf32>
    %cst_19 = arith.constant dense<0.000000e+00> : vector<8x16xf32>
    %34 = tpu.matmul %31, %32, %cst_19 {dimension_numbers = #tpu.dot_dimension_numbers<[1], [1], [0], [0], [0, 0, 1, 0], [], []>} : vector<8x8xf32>, vector<16x8xf32>, vector<8x16xf32> -> vector<8x16xf32>
    %cst_20 = arith.constant 0.353553385 : f32
    %35 = vector.broadcast %cst_20 : f32 to vector<8x16xf32>
    %36 = arith.mulf %34, %35 : vector<8x16xf32>
    %cst_21 = arith.constant dense<0xFF800000> : vector<8xf32>
    %37 = vector.multi_reduction <maximumf>, %36, %cst_21 [1] : vector<8x16xf32> to vector<8xf32>
    %38 = vector.shape_cast %37 : vector<8xf32> to vector<8x1xf32>
    %39 = vector.broadcast %38 : vector<8x1xf32> to vector<8x16xf32>
    %40 = arith.subf %36, %39 : vector<8x16xf32>
    %41 = math.exp %40 : vector<8x16xf32>
    %cst_22 = arith.constant dense<0.000000e+00> : vector<8xf32>
    %42 = vector.multi_reduction <add>, %41, %cst_22 [1] : vector<8x16xf32> to vector<8xf32>
    %43 = vector.shape_cast %42 : vector<8xf32> to vector<8x1xf32>
    %cst_23 = arith.constant dense<0.000000e+00> : vector<8x8xf32>
    %44 = tpu.matmul %41, %33, %cst_23 {dimension_numbers = #tpu.dot_dimension_numbers<[1], [0], [0], [1], [0, 0, 1, 1], [], []>} : vector<8x16xf32>, vector<16x8xf32>, vector<8x8xf32> -> vector<8x8xf32>
    %45 = tpu.reciprocal %43 {approx = true} : vector<8x1xf32> -> vector<8x1xf32>
    %46 = vector.broadcast %45 : vector<8x1xf32> to vector<8x8xf32>
    %47 = arith.mulf %44, %46 : vector<8x8xf32>
    %48 = vector.extract_strided_slice %8 {offsets = [0, 16], sizes = [8, 8], strides = [1, 1]} : vector<8x32xf32> to vector<8x8xf32>
    %49 = vector.extract_strided_slice %13 {offsets = [0, 16], sizes = [16, 8], strides = [1, 1]} : vector<16x64xf32> to vector<16x8xf32>
    %50 = vector.extract_strided_slice %13 {offsets = [0, 48], sizes = [16, 8], strides = [1, 1]} : vector<16x64xf32> to vector<16x8xf32>
    %cst_24 = arith.constant dense<0.000000e+00> : vector<8x16xf32>
    %51 = tpu.matmul %48, %49, %cst_24 {dimension_numbers = #tpu.dot_dimension_numbers<[1], [1], [0], [0], [0, 0, 1, 0], [], []>} : vector<8x8xf32>, vector<16x8xf32>, vector<8x16xf32> -> vector<8x16xf32>
    %cst_25 = arith.constant 0.353553385 : f32
    %52 = vector.broadcast %cst_25 : f32 to vector<8x16xf32>
    %53 = arith.mulf %51, %52 : vector<8x16xf32>
    %cst_26 = arith.constant dense<0xFF800000> : vector<8xf32>
    %54 = vector.multi_reduction <maximumf>, %53, %cst_26 [1] : vector<8x16xf32> to vector<8xf32>
    %55 = vector.shape_cast %54 : vector<8xf32> to vector<8x1xf32>
    %56 = vector.broadcast %55 : vector<8x1xf32> to vector<8x16xf32>
    %57 = arith.subf %53, %56 : vector<8x16xf32>
    %58 = math.exp %57 : vector<8x16xf32>
    %cst_27 = arith.constant dense<0.000000e+00> : vector<8xf32>
    %59 = vector.multi_reduction <add>, %58, %cst_27 [1] : vector<8x16xf32> to vector<8xf32>
    %60 = vector.shape_cast %59 : vector<8xf32> to vector<8x1xf32>
    %cst_28 = arith.constant dense<0.000000e+00> : vector<8x8xf32>
    %61 = tpu.matmul %58, %50, %cst_28 {dimension_numbers = #tpu.dot_dimension_numbers<[1], [0], [0], [1], [0, 0, 1, 1], [], []>} : vector<8x16xf32>, vector<16x8xf32>, vector<8x8xf32> -> vector<8x8xf32>
    %62 = tpu.reciprocal %60 {approx = true} : vector<8x1xf32> -> vector<8x1xf32>
    %63 = vector.broadcast %62 : vector<8x1xf32> to vector<8x8xf32>
    %64 = arith.mulf %61, %63 : vector<8x8xf32>
    %65 = vector.extract_strided_slice %8 {offsets = [0, 24], sizes = [8, 8], strides = [1, 1]} : vector<8x32xf32> to vector<8x8xf32>
    %66 = vector.extract_strided_slice %13 {offsets = [0, 24], sizes = [16, 8], strides = [1, 1]} : vector<16x64xf32> to vector<16x8xf32>
    %67 = vector.extract_strided_slice %13 {offsets = [0, 56], sizes = [16, 8], strides = [1, 1]} : vector<16x64xf32> to vector<16x8xf32>
    %cst_29 = arith.constant dense<0.000000e+00> : vector<8x16xf32>
    %68 = tpu.matmul %65, %66, %cst_29 {dimension_numbers = #tpu.dot_dimension_numbers<[1], [1], [0], [0], [0, 0, 1, 0], [], []>} : vector<8x8xf32>, vector<16x8xf32>, vector<8x16xf32> -> vector<8x16xf32>
    %cst_30 = arith.constant 0.353553385 : f32
    %69 = vector.broadcast %cst_30 : f32 to vector<8x16xf32>
    %70 = arith.mulf %68, %69 : vector<8x16xf32>
    %cst_31 = arith.constant dense<0xFF800000> : vector<8xf32>
    %71 = vector.multi_reduction <maximumf>, %70, %cst_31 [1] : vector<8x16xf32> to vector<8xf32>
    %72 = vector.shape_cast %71 : vector<8xf32> to vector<8x1xf32>
    %73 = vector.broadcast %72 : vector<8x1xf32> to vector<8x16xf32>
    %74 = arith.subf %70, %73 : vector<8x16xf32>
    %75 = math.exp %74 : vector<8x16xf32>
    %cst_32 = arith.constant dense<0.000000e+00> : vector<8xf32>
    %76 = vector.multi_reduction <add>, %75, %cst_32 [1] : vector<8x16xf32> to vector<8xf32>
    %77 = vector.shape_cast %76 : vector<8xf32> to vector<8x1xf32>
    %cst_33 = arith.constant dense<0.000000e+00> : vector<8x8xf32>
    %78 = tpu.matmul %75, %67, %cst_33 {dimension_numbers = #tpu.dot_dimension_numbers<[1], [0], [0], [1], [0, 0, 1, 1], [], []>} : vector<8x16xf32>, vector<16x8xf32>, vector<8x8xf32> -> vector<8x8xf32>
    %79 = tpu.reciprocal %77 {approx = true} : vector<8x1xf32> -> vector<8x1xf32>
    %80 = vector.broadcast %79 : vector<8x1xf32> to vector<8x8xf32>
    %81 = arith.mulf %78, %80 : vector<8x8xf32>
    %82 = tpu.concatenate %30, %47, %64, %81 in 1 : vector<8x8xf32>, vector<8x8xf32>, vector<8x8xf32>, vector<8x8xf32> -> vector<8x32xf32>
    %c0_34 = arith.constant 0 : index
    %c0_35 = arith.constant 0 : index
    %83 = vector.load %arg7[%c0_34, %c0_35] : memref<32x32xf32, #tpu.memory_space<vmem>>, vector<32x32xf32>
    %cst_36 = arith.constant dense<0.000000e+00> : vector<8x32xf32>
    %84 = tpu.matmul %82, %83, %cst_36 {dimension_numbers = #tpu.dot_dimension_numbers<[1], [1], [0], [0], [0, 0, 1, 0], [], []>} : vector<8x32xf32>, vector<32x32xf32>, vector<8x32xf32> -> vector<8x32xf32>
    %c0_37 = arith.constant 0 : index
    %c0_38 = arith.constant 0 : index
    %85 = vector.load %arg8[%c0_37, %c0_38] : memref<1x32xf32, #tpu.memory_space<vmem>>, vector<1x32xf32>
    %86 = vector.broadcast %85 : vector<1x32xf32> to vector<8x32xf32>
    %87 = arith.addf %84, %86 : vector<8x32xf32>
    %c0_39 = arith.constant 0 : index
    %c0_40 = arith.constant 0 : index
    %c0_41 = arith.constant 0 : index
    %88 = vector.load %arg9[%c0_39, %c0_40, %c0_41] : memref<1x8x32xf32, #tpu.memory_space<vmem>>, vector<1x8x32xf32>
    %89 = vector.shape_cast %88 : vector<1x8x32xf32> to vector<8x32xf32>
    %90 = vector.shape_cast %87 : vector<8x32xf32> to vector<1x8x32xf32>
    tpu.vector_store %arg9[%c0_39, %c0_40, %c0_41], %90 {strides = array<i32>} : memref<1x8x32xf32, #tpu.memory_space<vmem>>, vector<1x8x32xf32>,
    return
  }
  func.func @transform_0(%arg0: i32) -> (i32, i32, i32) {
    %c0_i32 = arith.constant 0 : i32
    %c0_i32_0 = arith.constant 0 : i32
    %c0_i32_1 = arith.constant 0 : i32
    return %arg0, %c0_i32, %c0_i32_0 : i32, i32, i32
  }
  func.func @transform_1(%arg0: i32) -> (i32, i32, i32) {
    %c0_i32 = arith.constant 0 : i32
    %c0_i32_0 = arith.constant 0 : i32
    %c0_i32_1 = arith.constant 0 : i32
    return %arg0, %c0_i32, %c0_i32_0 : i32, i32, i32
  }
  func.func @transform_2(%arg0: i32) -> (i32, i32) {
    %c0_i32 = arith.constant 0 : i32
    %c0_i32_0 = arith.constant 0 : i32
    %c0_i32_1 = arith.constant 0 : i32
    return %c0_i32, %c0_i32_0 : i32, i32
  }
  func.func @transform_3(%arg0: i32) -> (i32, i32) {
    %c0_i32 = arith.constant 0 : i32
    %c0_i32_0 = arith.constant 0 : i32
    %c0_i32_1 = arith.constant 0 : i32
    return %c0_i32, %c0_i32_0 : i32, i32
  }
  func.func @transform_4(%arg0: i32) -> (i32, i32) {
    %c0_i32 = arith.constant 0 : i32
    %c0_i32_0 = arith.constant 0 : i32
    %c0_i32_1 = arith.constant 0 : i32
    return %c0_i32, %c0_i32_0 : i32, i32
  }
  func.func @transform_5(%arg0: i32) -> (i32, i32) {
    %c0_i32 = arith.constant 0 : i32
    %c0_i32_0 = arith.constant 0 : i32
    %c0_i32_1 = arith.constant 0 : i32
    return %c0_i32, %c0_i32_0 : i32, i32
  }
  func.func @transform_6(%arg0: i32) -> (i32, i32) {
    %c0_i32 = arith.constant 0 : i32
    %c0_i32_0 = arith.constant 0 : i32
    %c0_i32_1 = arith.constant 0 : i32
    return %c0_i32, %c0_i32_0 : i32, i32
  }
  func.func @transform_7(%arg0: i32) -> (i32, i32) {
    %c0_i32 = arith.constant 0 : i32
    %c0_i32_0 = arith.constant 0 : i32
    %c0_i32_1 = arith.constant 0 : i32
    return %c0_i32, %c0_i32_0 : i32, i32
  }
  func.func @transform_8(%arg0: i32) -> (i32, i32, i32) {
    %c0_i32 = arith.constant 0 : i32
    %c0_i32_0 = arith.constant 0 : i32
    %c0_i32_1 = arith.constant 0 : i32
    return %arg0, %c0_i32, %c0_i32_0 : i32, i32, i32
  }
}

</mosaic_0001>

<llo_original>
// kernel: tpu_custom_call.1
$region0: #{tpu_custom_call.1}
  #allocation0 [shape = 'u32[]', space=smem, size = 0x4, offset = 0x4, fixed_abs, tag = 'smem constant byte address 0x4 - core index']
  #allocation1 [shape = 'u32[72,128]{1,0:T(1,128)}', space=vmem, size = 0x9000, scoped, tag = 'internal scratch']
  %s0 = inlined_call_operand.hbm [shape: f32[2,8,32], index: 0, kind: input, shape index: {}]
  %s1 = inlined_call_operand.vmem [shape: f32[2,16,32], index: 1, kind: input, shape index: {}]
  %s2 = inlined_call_operand.vmem [shape: f32[32,32], index: 2, kind: input, shape index: {}]
  %s3 = inlined_call_operand.vmem [shape: f32[1,32], index: 3, kind: input, shape index: {}]
  %s4 = inlined_call_operand.vmem [shape: f32[64,32], index: 4, kind: input, shape index: {}]
  %s5 = inlined_call_operand.vmem [shape: f32[1,64], index: 5, kind: input, shape index: {}]
  %s6 = inlined_call_operand.vmem [shape: f32[32,32], index: 6, kind: input, shape index: {}]
  %s7 = inlined_call_operand.vmem [shape: f32[1,32], index: 7, kind: input, shape index: {}]
  %s8 = inlined_call_operand.hbm [shape: f32[2,8,32], index: 8, kind: output, shape index: {}]
  %s9 = sld [smem:[#allocation0]]
  $region69: #{tpu_custom_call.1} parent=0
    _
  %s11 = ssub.s32 1, %s9
  %s12 = scalar_select 0, %s11, %s9
  $region1: #{tpu_custom_call.1} parent=0
    #allocation2 [shape = 'u8[8192]{0}', space=vmem, size = 0x2000, scoped, tag = 'input window, operand 0']
    #allocation3 [shape = 's32[2]{0}', space=sflag, size = 0x8, scoped, tag = 'scoped memory for tpu_custom_call.1']
    #allocation4 [shape = 's32[2]{0}', space=sflag, size = 0x8, scoped, tag = 'scoped memory for tpu_custom_call.1']
    #allocation5 [shape = 'u8[8192]{0}', space=vmem, size = 0x2000, scoped, tag = 'output window, operand 0']
    %13 = vsyncpa [#allocation3], 0
    %s14 = scalar_lea.sflag [#allocation3], 1
    %15 = vsyncpa %s14, 0
    %16 = vsyncpa [#allocation4], 0
    %s17 = scalar_lea.sflag [#allocation4], 1
    %18 = vsyncpa %s17, 0
    loop: start=0, step=1, limit=4
    $region2: #{tpu_custom_call.1} parent=1 // loop_pre_header
      _
    $region3: #{tpu_custom_call.1} parent=1 // loop_header
      %s20 = sphi 0, %s24
      %p21 = scmp.ge.s32.totalorder %s20, 4
      %s30 = sphi 0, %s32
      %s33 = sphi 0, %s30
      %s34 = sphi 0, %s33
      %s50 = sphi 0, %s34
      %s56 = sphi 0, %s58
      %s59 = sphi 0, %s56
      %s60 = sphi 0, %s59
      %s76 = sphi 0, %s60
      %s80 = sphi 0, %s80
      %s82 = sphi 0, %s80
      %s83 = sphi 0, %s82
      %s97 = sphi 0, %s83
      %s101 = sphi 0, %s101
      %s103 = sphi 0, %s101
      %s104 = sphi 0, %s103
      %s118 = sphi 0, %s104
      %s122 = sphi 0, %s122
      %s124 = sphi 0, %s122
      %s125 = sphi 0, %s124
      %s139 = sphi 0, %s125
      %s143 = sphi 0, %s143
      %s145 = sphi 0, %s143
      %s146 = sphi 0, %s145
      %s160 = sphi 0, %s146
      %s164 = sphi 0, %s164
      %s166 = sphi 0, %s164
      %s167 = sphi 0, %s166
      %s181 = sphi 0, %s167
      %s185 = sphi 0, %s185
      %s187 = sphi 0, %s185
      %s188 = sphi 0, %s187
      %s202 = sphi 0, %s188
      %s208 = sphi 0, %s210
      %s211 = sphi 0, %s208
      %s212 = sphi 0, %s211
      %s228 = sphi 0, %s212
    $region4: #{tpu_custom_call.1} parent=1 // loop_header_branch
      %23 = sbr.rel (%p21) target = $region8
    $region5: #{tpu_custom_call.1} parent=1 // loop_body
      %s25 = ssub.s32 %s20, 1
      %s26 = ssub.s32 %s20, 2
      %s27 = sadd.s32 %s20, 1
      %s28 = ssub.s32 %s20, %s27
      %p29 = scmp.eq.s32.totalorder %s28, 0
      %s31 = sadd.s32 %s30, 1
      %s32 = scalar_select %p29, %s30, %s31
      %p35 = pneg %p29
      %p36 = scmp.eq.s32.totalorder %s20, 1
      %p37 = por %p35, %p36
      %p38 = scmp.ne.s32.totalorder %s30, %s33
      %p39 = scmp.eq.s32.totalorder %s20, 0
      %p40 = por %p38, %p39
      %p41 = scmp.ne.s32.totalorder %s30, %s33
      %p42 = scmp.eq.s32.totalorder %s25, 1
      %p43 = por %p41, %p42
      %p44 = scmp.ne.s32.totalorder %s33, %s34
      %p45 = scmp.eq.s32.totalorder %s25, 0
      %p46 = por %p44, %p45
      %p47 = scmp.ne.s32.totalorder %s33, %s34
      %p48 = scmp.eq.s32.totalorder %s26, 1
      %p49 = por %p47, %p48
      %p51 = scmp.ne.s32.totalorder %s34, %s50
      %p52 = scmp.eq.s32.totalorder %s26, 0
      %p53 = por %p51, %p52
      %s54 = ssub.s32 %s20, %s27
      %p55 = scmp.eq.s32.totalorder %s54, 0
      %s57 = sadd.s32 %s56, 1
      %s58 = scalar_select %p55, %s56, %s57
      %p61 = pneg %p55
      %p62 = scmp.eq.s32.totalorder %s20, 1
      %p63 = por %p61, %p62
      %p64 = scmp.ne.s32.totalorder %s56, %s59
      %p65 = scmp.eq.s32.totalorder %s20, 0
      %p66 = por %p64, %p65
      %p67 = scmp.ne.s32.totalorder %s56, %s59
      %p68 = scmp.eq.s32.totalorder %s25, 1
      %p69 = por %p67, %p68
      %p70 = scmp.ne.s32.totalorder %s59, %s60
      %p71 = scmp.eq.s32.totalorder %s25, 0
      %p72 = por %p70, %p71
      %p73 = scmp.ne.s32.totalorder %s59, %s60
      %p74 = scmp.eq.s32.totalorder %s26, 1
      %p75 = por %p73, %p74
      %p77 = scmp.ne.s32.totalorder %s60, %s76
      %p78 = scmp.eq.s32.totalorder %s26, 0
      %p79 = por %p77, %p78
      %s81 = sadd.s32 %s80, 1
      %p84 = scmp.eq.s32.totalorder %s20, 1
      %p85 = scmp.ne.s32.totalorder %s80, %s82
      %p86 = scmp.eq.s32.totalorder %s20, 0
      %p87 = por %p85, %p86
      %p88 = scmp.ne.s32.totalorder %s80, %s82
      %p89 = scmp.eq.s32.totalorder %s25, 1
      %p90 = por %p88, %p89
      %p91 = scmp.ne.s32.totalorder %s82, %s83
      %p92 = scmp.eq.s32.totalorder %s25, 0
      %p93 = por %p91, %p92
      %p94 = scmp.ne.s32.totalorder %s82, %s83
      %p95 = scmp.eq.s32.totalorder %s26, 1
      %p96 = por %p94, %p95
      %p98 = scmp.ne.s32.totalorder %s83, %s97
      %p99 = scmp.eq.s32.totalorder %s26, 0
      %p100 = por %p98, %p99
      %s102 = sadd.s32 %s101, 1
      %p105 = scmp.eq.s32.totalorder %s20, 1
      %p106 = scmp.ne.s32.totalorder %s101, %s103
      %p107 = scmp.eq.s32.totalorder %s20, 0
      %p108 = por %p106, %p107
      %p109 = scmp.ne.s32.totalorder %s101, %s103
      %p110 = scmp.eq.s32.totalorder %s25, 1
      %p111 = por %p109, %p110
      %p112 = scmp.ne.s32.totalorder %s103, %s104
      %p113 = scmp.eq.s32.totalorder %s25, 0
      %p114 = por %p112, %p113
      %p115 = scmp.ne.s32.totalorder %s103, %s104
      %p116 = scmp.eq.s32.totalorder %s26, 1
      %p117 = por %p115, %p116
      %p119 = scmp.ne.s32.totalorder %s104, %s118
      %p120 = scmp.eq.s32.totalorder %s26, 0
      %p121 = por %p119, %p120
      %s123 = sadd.s32 %s122, 1
      %p126 = scmp.eq.s32.totalorder %s20, 1
      %p127 = scmp.ne.s32.totalorder %s122, %s124
      %p128 = scmp.eq.s32.totalorder %s20, 0
      %p129 = por %p127, %p128
      %p130 = scmp.ne.s32.totalorder %s122, %s124
      %p131 = scmp.eq.s32.totalorder %s25, 1
      %p132 = por %p130, %p131
      %p133 = scmp.ne.s32.totalorder %s124, %s125
      %p134 = scmp.eq.s32.totalorder %s25, 0
      %p135 = por %p133, %p134
      %p136 = scmp.ne.s32.totalorder %s124, %s125
      %p137 = scmp.eq.s32.totalorder %s26, 1
      %p138 = por %p136, %p137
      %p140 = scmp.ne.s32.totalorder %s125, %s139
      %p141 = scmp.eq.s32.totalorder %s26, 0
      %p142 = por %p140, %p141
      %s144 = sadd.s32 %s143, 1
      %p147 = scmp.eq.s32.totalorder %s20, 1
      %p148 = scmp.ne.s32.totalorder %s143, %s145
      %p149 = scmp.eq.s32.totalorder %s20, 0
      %p150 = por %p148, %p149
      %p151 = scmp.ne.s32.totalorder %s143, %s145
      %p152 = scmp.eq.s32.totalorder %s25, 1
      %p153 = por %p151, %p152
      %p154 = scmp.ne.s32.totalorder %s145, %s146
      %p155 = scmp.eq.s32.totalorder %s25, 0
      %p156 = por %p154, %p155
      %p157 = scmp.ne.s32.totalorder %s145, %s146
      %p158 = scmp.eq.s32.totalorder %s26, 1
      %p159 = por %p157, %p158
      %p161 = scmp.ne.s32.totalorder %s146, %s160
      %p162 = scmp.eq.s32.totalorder %s26, 0
      %p163 = por %p161, %p162
      %s165 = sadd.s32 %s164, 1
      %p168 = scmp.eq.s32.totalorder %s20, 1
      %p169 = scmp.ne.s32.totalorder %s164, %s166
      %p170 = scmp.eq.s32.totalorder %s20, 0
      %p171 = por %p169, %p170
      %p172 = scmp.ne.s32.totalorder %s164, %s166
      %p173 = scmp.eq.s32.totalorder %s25, 1
      %p174 = por %p172, %p173
      %p175 = scmp.ne.s32.totalorder %s166, %s167
      %p176 = scmp.eq.s32.totalorder %s25, 0
      %p177 = por %p175, %p176
      %p178 = scmp.ne.s32.totalorder %s166, %s167
      %p179 = scmp.eq.s32.totalorder %s26, 1
      %p180 = por %p178, %p179
      %p182 = scmp.ne.s32.totalorder %s167, %s181
      %p183 = scmp.eq.s32.totalorder %s26, 0
      %p184 = por %p182, %p183
      %s186 = sadd.s32 %s185, 1
      %p189 = scmp.eq.s32.totalorder %s20, 1
      %p190 = scmp.ne.s32.totalorder %s185, %s187
      %p191 = scmp.eq.s32.totalorder %s20, 0
      %p192 = por %p190, %p191
      %p193 = scmp.ne.s32.totalorder %s185, %s187
      %p194 = scmp.eq.s32.totalorder %s25, 1
      %p195 = por %p193, %p194
      %p196 = scmp.ne.s32.totalorder %s187, %s188
      %p197 = scmp.eq.s32.totalorder %s25, 0
      %p198 = por %p196, %p197
      %p199 = scmp.ne.s32.totalorder %s187, %s188
      %p200 = scmp.eq.s32.totalorder %s26, 1
      %p201 = por %p199, %p200
      %p203 = scmp.ne.s32.totalorder %s188, %s202
      %p204 = scmp.eq.s32.totalorder %s26, 0
      %p205 = por %p203, %p204
      %s206 = ssub.s32 %s20, %s27
      %p207 = scmp.eq.s32.totalorder %s206, 0
      %s209 = sadd.s32 %s208, 1
      %s210 = scalar_select %p207, %s208, %s209
      %p213 = pneg %p207
      %p214 = scmp.eq.s32.totalorder %s20, 1
      %p215 = por %p213, %p214
      %p216 = scmp.ne.s32.totalorder %s208, %s211
      %p217 = scmp.eq.s32.totalorder %s20, 0
      %p218 = por %p216, %p217
      %p219 = scmp.ne.s32.totalorder %s208, %s211
      %p220 = scmp.eq.s32.totalorder %s25, 1
      %p221 = por %p219, %p220
      %p222 = scmp.ne.s32.totalorder %s211, %s212
      %p223 = scmp.eq.s32.totalorder %s25, 0
      %p224 = por %p222, %p223
      %p225 = scmp.ne.s32.totalorder %s211, %s212
      %p226 = scmp.eq.s32.totalorder %s26, 1
      %p227 = por %p225, %p226
      %p229 = scmp.ne.s32.totalorder %s212, %s228
      %p230 = scmp.eq.s32.totalorder %s26, 0
      %p231 = por %p229, %p230
      %p232 = scmp.le.s32.totalorder 1, %s20
      %p233 = scmp.lt.s32.totalorder %s20, 3
      %p234 = pnand %p232, %p233
      %p235 = pneg %p234
      // Predicated region
      $region9: #{tpu_custom_call.1} parent=5 // pred_check
        _
      $region10: #{tpu_custom_call.1} parent=5 // pred_check_branch
        %237 = sbr.rel (%p234) target = $region12
      $region11: #{tpu_custom_call.1} parent=5 // pred_region
        %s238 = ssub.s32 %s20, 1
        // Predicated region
        $region13: #{tpu_custom_call.1} parent=11 // pred_check
          %p239 = pneg %p93
        $region14: #{tpu_custom_call.1} parent=11 // pred_check_branch
          %241 = sbr.rel (%p239) target = $region16
        $region15: #{tpu_custom_call.1} parent=11 // pred_region
          _
        $region16: #{tpu_custom_call.1} parent=11 // pred_fallthru
          _
        // Predicated region
        $region17: #{tpu_custom_call.1} parent=11 // pred_check
          %p242 = pneg %p114
        $region18: #{tpu_custom_call.1} parent=11 // pred_check_branch
          %244 = sbr.rel (%p242) target = $region20
        $region19: #{tpu_custom_call.1} parent=11 // pred_region
          _
        $region20: #{tpu_custom_call.1} parent=11 // pred_fallthru
          _
        // Predicated region
        $region21: #{tpu_custom_call.1} parent=11 // pred_check
          %p245 = pneg %p135
        $region22: #{tpu_custom_call.1} parent=11 // pred_check_branch
          %247 = sbr.rel (%p245) target = $region24
        $region23: #{tpu_custom_call.1} parent=11 // pred_region
          _
        $region24: #{tpu_custom_call.1} parent=11 // pred_fallthru
          _
        // Predicated region
        $region25: #{tpu_custom_call.1} parent=11 // pred_check
          %p248 = pneg %p156
        $region26: #{tpu_custom_call.1} parent=11 // pred_check_branch
          %250 = sbr.rel (%p248) target = $region28
        $region27: #{tpu_custom_call.1} parent=11 // pred_region
          _
        $region28: #{tpu_custom_call.1} parent=11 // pred_fallthru
          _
        // Predicated region
        $region29: #{tpu_custom_call.1} parent=11 // pred_check
          %p251 = pneg %p177
        $region30: #{tpu_custom_call.1} parent=11 // pred_check_branch
          %253 = sbr.rel (%p251) target = $region32
        $region31: #{tpu_custom_call.1} parent=11 // pred_region
          _
        $region32: #{tpu_custom_call.1} parent=11 // pred_fallthru
          _
        // Predicated region
        $region33: #{tpu_custom_call.1} parent=11 // pred_check
          %p254 = pneg %p198
        $region34: #{tpu_custom_call.1} parent=11 // pred_check_branch
          %256 = sbr.rel (%p254) target = $region36
        $region35: #{tpu_custom_call.1} parent=11 // pred_region
          _
        $region36: #{tpu_custom_call.1} parent=11 // pred_fallthru
          _
      $region12: #{tpu_custom_call.1} parent=5 // pred_fallthru
        _
      %p257 = scmp.lt.s32.totalorder %s20, 2
      // Predicated region
      $region37: #{tpu_custom_call.1} parent=5 // pred_check
        %p258 = pneg %p257
      $region38: #{tpu_custom_call.1} parent=5 // pred_check_branch
        %260 = sbr.rel (%p258) target = $region40
      $region39: #{tpu_custom_call.1} parent=5 // pred_region
        // Predicated region
        $region41: #{tpu_custom_call.1} parent=39 // pred_check
          %p261 = pneg %p40
        $region42: #{tpu_custom_call.1} parent=39 // pred_check_branch
          %263 = sbr.rel (%p261) target = $region44
        $region43: #{tpu_custom_call.1} parent=39 // pred_region
          %s264 = sand.u32 %s30, 1
          %s265 = scalar_lea.sflag [#allocation3], %s264
          %s266 = sand.u32 %s30, 1
          %s267 = smul.addr %s266, 8
          %s268 = scalar_lea.vmem [#allocation2], %s267
          %270 = vsyncadd %s265, 0
          %s271 = smul.addr %s20, 8
          %s272 = scalar_lea.hbm %s0, %s271
          %s274 = sshll.u32 %s272, 4
          %s275 = int_to_ptr.hbm [resolvable:$true] %s274
          %s276 = sshll.u32 %s268, 4
          %s277 = int_to_ptr.vmem [resolvable:$true] %s276
          %279 = dma.hbm_to_vmem [thread:$0]  %s275, 128, %s277, %s265
        $region44: #{tpu_custom_call.1} parent=39 // pred_fallthru
          _
        // Predicated region
        $region45: #{tpu_custom_call.1} parent=39 // pred_check
          %p280 = pneg %p66
        $region46: #{tpu_custom_call.1} parent=39 // pred_check_branch
          %282 = sbr.rel (%p280) target = $region48
        $region47: #{tpu_custom_call.1} parent=39 // pred_region
          %p283 = scmp.lt.s32.totalorder %s20, 1
          %s284 = scalar_select %p283, %s20, 1
          %s285 = smul.addr %s284, 2
          %s286 = smul.addr %s285, 8
          %s287 = scalar_lea.vmem %s1, %s286
        $region48: #{tpu_custom_call.1} parent=39 // pred_fallthru
          _
      $region40: #{tpu_custom_call.1} parent=5 // pred_fallthru
        _
      %p288 = scmp.le.s32.totalorder 1, %s20
      %p289 = scmp.lt.s32.totalorder %s20, 3
      %p290 = pnand %p288, %p289
      %p291 = pneg %p290
      // Predicated region
      $region49: #{tpu_custom_call.1} parent=5 // pred_check
        _
      $region50: #{tpu_custom_call.1} parent=5 // pred_check_branch
        %293 = sbr.rel (%p290) target = $region52
      $region51: #{tpu_custom_call.1} parent=5 // pred_region
        %s294 = ssub.s32 %s20, 1
        %s295 = sand.u32 %s33, 1
        %s296 = scalar_lea.sflag [#allocation3], %s295
        %s297 = sand.u32 %s33, 1
        %s298 = smul.addr %s297, 8
        %s299 = scalar_lea.vmem [#allocation2], %s298
        // Predicated region
        $region53: #{tpu_custom_call.1} parent=51 // pred_check
          %p300 = pneg %p46
        $region54: #{tpu_custom_call.1} parent=51 // pred_check_branch
          %302 = sbr.rel (%p300) target = $region56
        $region55: #{tpu_custom_call.1} parent=51 // pred_region
          %304 = dma.done %s296, 128
        $region56: #{tpu_custom_call.1} parent=51 // pred_fallthru
          _
        %s305 = sand.u32 %s33, 1
        %s306 = scalar_lea.sflag [#allocation3], %s305
        %s307 = sand.u32 %s33, 1
        %s308 = smul.addr %s307, 8
        %s309 = scalar_lea.vmem [#allocation2], %s308
        %p310 = pneg %p46
        %p311 = pneg %p43
        %p312 = scmp.lt.s32.totalorder %s25, 1
        %s313 = scalar_select %p312, %s25, 1
        %s314 = smul.addr %s313, 2
        %s315 = smul.addr %s314, 8
        %s316 = scalar_lea.vmem %s1, %s315
        %p317 = pneg %p72
        %p318 = pneg %p69
        %p319 = pneg %p93
        %p320 = pneg %p90
        %p321 = pneg %p114
        %p322 = pneg %p111
        %p323 = pneg %p135
        %p324 = pneg %p132
        %p325 = pneg %p156
        %p326 = pneg %p153
        %p327 = pneg %p177
        %p328 = pneg %p174
        %p329 = pneg %p198
        %p330 = pneg %p195
        %p331 = pneg %p224
        %p332 = pneg %p221
        %s333 = sand.u32 %s211, 1
        %s334 = scalar_lea.sflag [#allocation4], %s333
        %s335 = sand.u32 %s211, 1
        %s336 = smul.addr %s335, 8
        %s337 = scalar_lea.vmem [#allocation5], %s336
        %p338 = scmp.lt.s32.totalorder %s25, 1
        %s339 = scalar_select %p338, %s25, 1
        %s340 = smul.addr %s339, 2
        %s341 = smul.addr %s340, 8
        %s342 = scalar_lea.vmem %s1, %s341
        %v343 = vld [vmem:[%s299] sm:$0xff]
        %v344 = vld [vmem:[%s342] sm:$0xff]
        %v345 = vld [vmem:[%s342 + $0x8] sm:$0xff]
        %v346 = vld [vmem:[%s2] sm:$0xff]
        %v347 = vld [vmem:[%s2 + $0x8] sm:$0xff]
        %v348 = vld [vmem:[%s2 + $0x10] sm:$0xff]
        %v349 = vld [vmem:[%s2 + $0x18] sm:$0xff]
        %v350 = vld [vmem:[%s3] sm:$0x1]
        %v352 = vperm.slane %v350, 0
        %vm354 = vcmask 261120
        %v356 = vsel %vm354, %v343, 0
        %v359 = vsel %vm354, %v346, 0
        %v362 = vsel %vm354, %v347, 0
        %v365 = vsel %vm354, %v348, 0
        %v368 = vsel %vm354, %v349, 0
        %370 = vmatpush.xpose.msra.mxu0 0.0
        %371 = vmatpush.xpose.msra.mxu0 0.0
        %372 = vmatpush.xpose.msra.mxu0 0.0
        %373 = vmatpush.xpose.msra.mxu0 0.0
        %374 = vmatpush.xpose.msra.mxu0 0.0
        %375 = vmatpush.xpose.msra.mxu0 0.0
        %376 = vmatpush.xpose.msra.mxu0 0.0
        %377 = vmatpush.xpose.msra.mxu0 0.0
        %378 = vmatpush.xpose.msra.mxu0 0.0
        %379 = vmatpush.xpose.msra.mxu0 0.0
        %380 = vmatpush.xpose.msra.mxu0 0.0
        %381 = vmatpush.xpose.msra.mxu0 0.0
        %382 = vmatpush.xpose.msra.mxu0 %v368
        %383 = vmatpush.xpose.msra.mxu0 %v365
        %384 = vmatpush.xpose.msra.mxu0 %v362
        %385 = vmatpush.xpose.msra.mxu0 %v359
        %386 = vmatmul.f32.gmra.mxu0 %v356
        %v387 = vpop.f32.mrf.mxu0
        %v388 = vadd.f32 %v352, %v387
        %389 = vdwg.mxu0
        %v390 = vld [vmem:[%s4] sm:$0xff]
        %v391 = vld [vmem:[%s4 + $0x8] sm:$0xff]
        %v392 = vld [vmem:[%s4 + $0x10] sm:$0xff]
        %v393 = vld [vmem:[%s4 + $0x18] sm:$0xff]
        %v394 = vld [vmem:[%s4 + $0x20] sm:$0xff]
        %v395 = vld [vmem:[%s4 + $0x28] sm:$0xff]
        %v396 = vld [vmem:[%s4 + $0x30] sm:$0xff]
        %v397 = vld [vmem:[%s4 + $0x38] sm:$0xff]
        %v398 = vld [vmem:[%s5] sm:$0x1]
        %v400 = vperm.slane %v398, 0
        %v403 = vsel %vm354, %v344, 0
        %v406 = vsel %vm354, %v345, 0
        %v409 = vsel %vm354, %v390, 0
        %v412 = vsel %vm354, %v391, 0
        %v415 = vsel %vm354, %v392, 0
        %v418 = vsel %vm354, %v393, 0
        %v421 = vsel %vm354, %v394, 0
        %v424 = vsel %vm354, %v395, 0
        %v427 = vsel %vm354, %v396, 0
        %v430 = vsel %vm354, %v397, 0
        %432 = vmatpush.xpose.msra.mxu0 0.0
        %433 = vmatpush.xpose.msra.mxu0 0.0
        %434 = vmatpush.xpose.msra.mxu0 0.0
        %435 = vmatpush.xpose.msra.mxu0 0.0
        %436 = vmatpush.xpose.msra.mxu0 0.0
        %437 = vmatpush.xpose.msra.mxu0 0.0
        %438 = vmatpush.xpose.msra.mxu0 0.0
        %439 = vmatpush.xpose.msra.mxu0 0.0
        %440 = vmatpush.xpose.msra.mxu0 %v430
        %441 = vmatpush.xpose.msra.mxu0 %v427
        %442 = vmatpush.xpose.msra.mxu0 %v424
        %443 = vmatpush.xpose.msra.mxu0 %v421
        %444 = vmatpush.xpose.msra.mxu0 %v418
        %445 = vmatpush.xpose.msra.mxu0 %v415
        %446 = vmatpush.xpose.msra.mxu0 %v412
        %447 = vmatpush.xpose.msra.mxu0 %v409
        %448 = vmatmul.f32.gmra.mxu0 %v403
        %v449 = vpop.f32.mrf.mxu0
        %v450 = vadd.f32 %v400, %v449
        %451 = vmatmul.f32.gmra.mxu0 %v406
        %v452 = vpop.f32.mrf.mxu0
        %v453 = vadd.f32 %v400, %v452
        %454 = vdwg.mxu0
        %vm455 = vcmask 64512
        %v457 = vsel %vm455, %v388, 0
        %v460 = vsel %vm455, %v450, 0
        %v463 = vsel %vm455, %v453, 0
        %465 = vmatpush.xpose.msra.mxu0 0.0
        %466 = vmatpush.xpose.msra.mxu0 0.0
        %467 = vmatpush.xpose.msra.mxu0 0.0
        %468 = vmatpush.xpose.msra.mxu0 0.0
        %469 = vmatpush.xpose.msra.mxu0 0.0
        %470 = vmatpush.xpose.msra.mxu0 0.0
        %471 = vmatpush.xpose.msra.mxu0 0.0
        %472 = vmatpush.xpose.msra.mxu0 0.0
        %473 = vmatpush.xpose.msra.mxu0 0.0
        %474 = vmatpush.xpose.msra.mxu0 0.0
        %475 = vmatpush.xpose.msra.mxu0 0.0
        %476 = vmatpush.xpose.msra.mxu0 0.0
        %477 = vmatpush.xpose.msra.mxu0 0.0
        %478 = vmatpush.xpose.msra.mxu0 0.0
        %479 = vmatpush.xpose.msra.mxu0 %v463
        %480 = vmatpush.xpose.msra.mxu0 %v460
        %481 = vmatmul.f32.gmra.mxu0 %v457
        %v482 = vpop.f32.mrf.mxu0
        %v483 = vadd.f32 0.0, %v482
        %484 = vdwg.mxu0
        %v485 = vmul.f32 %v483, 0.35355338
        %vm486 = vcmask 130048
        %v487 = vsel %vm486, %v485, -inf
        %488 = vmax.xlane.f32.xlu0 %v487
        %v489 = vpop.xlane.xlu0 %488
        %v490 = vsub.f32 %v485, %v489
        %v491 = vmul.f32 %v490, 1.442695
        %v492 = vpow.pop %v491
        %v493 = vsel %vm486, %v492, 0.0
        %494 = vadd.xlane.f32.xlu0 %v493
        %v495 = vpop.xlane.xlu0 %494
        %496 = vrot.lane.b32.xlu0 %v450, 96
        %v497 = vpop.permute.xlu0 %496
        %498 = vrot.lane.b32.xlu0 %v453, 96
        %v499 = vpop.permute.xlu0 %498
        %v503 = vsel %vm486, %v492, 0
        %505 = vmatpush.msra.mxu0 0.0
        %506 = vmatpush.msra.mxu0 0.0
        %507 = vmatpush.msra.mxu0 0.0
        %508 = vmatpush.msra.mxu0 0.0
        %509 = vmatpush.msra.mxu0 0.0
        %510 = vmatpush.msra.mxu0 0.0
        %511 = vmatpush.msra.mxu0 0.0
        %512 = vmatpush.msra.mxu0 0.0
        %513 = vmatpush.msra.mxu0 0.0
        %514 = vmatpush.msra.mxu0 0.0
        %515 = vmatpush.msra.mxu0 0.0
        %516 = vmatpush.msra.mxu0 0.0
        %517 = vmatpush.msra.mxu0 0.0
        %518 = vmatpush.msra.mxu0 0.0
        %519 = vmatpush.msra.mxu0 %v499
        %520 = vmatpush.msra.mxu0 %v497
        %521 = vmatmul.f32.gmra.mxu0 %v503
        %v522 = vpop.f32.mrf.mxu0
        %v523 = vadd.f32 0.0, %v522
        %524 = vdwg.mxu0
        %v525 = vrcp.pop %v495
        %v526 = vmul.f32 %v523, %v525
        %527 = vrot.lane.b32.xlu0 %v388, 120
        %v528 = vpop.permute.xlu0 %527
        %529 = vrot.lane.b32.xlu0 %v450, 120
        %v530 = vpop.permute.xlu0 %529
        %531 = vrot.lane.b32.xlu0 %v453, 120
        %v532 = vpop.permute.xlu0 %531
        %v533 = vsel %vm455, %v528, 0
        %v535 = vsel %vm455, %v530, 0
        %v537 = vsel %vm455, %v532, 0
        %539 = vmatpush.xpose.msra.mxu0 0.0
        %540 = vmatpush.xpose.msra.mxu0 0.0
        %541 = vmatpush.xpose.msra.mxu0 0.0
        %542 = vmatpush.xpose.msra.mxu0 0.0
        %543 = vmatpush.xpose.msra.mxu0 0.0
        %544 = vmatpush.xpose.msra.mxu0 0.0
        %545 = vmatpush.xpose.msra.mxu0 0.0
        %546 = vmatpush.xpose.msra.mxu0 0.0
        %547 = vmatpush.xpose.msra.mxu0 0.0
        %548 = vmatpush.xpose.msra.mxu0 0.0
        %549 = vmatpush.xpose.msra.mxu0 0.0
        %550 = vmatpush.xpose.msra.mxu0 0.0
        %551 = vmatpush.xpose.msra.mxu0 0.0
        %552 = vmatpush.xpose.msra.mxu0 0.0
        %553 = vmatpush.xpose.msra.mxu0 %v537
        %554 = vmatpush.xpose.msra.mxu0 %v535
        %555 = vmatmul.f32.gmra.mxu0 %v533
        %v556 = vpop.f32.mrf.mxu0
        %v557 = vadd.f32 0.0, %v556
        %558 = vdwg.mxu0
        %v559 = vmul.f32 %v557, 0.35355338
        %v560 = vsel %vm486, %v559, -inf
        %561 = vmax.xlane.f32.xlu0 %v560
        %v562 = vpop.xlane.xlu0 %561
        %v563 = vsub.f32 %v559, %v562
        %v564 = vmul.f32 %v563, 1.442695
        %v565 = vpow.pop %v564
        %v566 = vsel %vm486, %v565, 0.0
        %567 = vadd.xlane.f32.xlu0 %v566
        %v568 = vpop.xlane.xlu0 %567
        %569 = vrot.lane.b32.xlu0 %v450, 88
        %v570 = vpop.permute.xlu0 %569
        %571 = vrot.lane.b32.xlu0 %v453, 88
        %v572 = vpop.permute.xlu0 %571
        %v576 = vsel %vm486, %v565, 0
        %578 = vmatpush.msra.mxu0 0.0
        %579 = vmatpush.msra.mxu0 0.0
        %580 = vmatpush.msra.mxu0 0.0
        %581 = vmatpush.msra.mxu0 0.0
        %582 = vmatpush.msra.mxu0 0.0
        %583 = vmatpush.msra.mxu0 0.0
        %584 = vmatpush.msra.mxu0 0.0
        %585 = vmatpush.msra.mxu0 0.0
        %586 = vmatpush.msra.mxu0 0.0
        %587 = vmatpush.msra.mxu0 0.0
        %588 = vmatpush.msra.mxu0 0.0
        %589 = vmatpush.msra.mxu0 0.0
        %590 = vmatpush.msra.mxu0 0.0
        %591 = vmatpush.msra.mxu0 0.0
        %592 = vmatpush.msra.mxu0 %v572
        %593 = vmatpush.msra.mxu0 %v570
        %594 = vmatmul.f32.gmra.mxu0 %v576
        %v595 = vpop.f32.mrf.mxu0
        %v596 = vadd.f32 0.0, %v595
        %597 = vdwg.mxu0
        %v598 = vrcp.pop %v568
        %v599 = vmul.f32 %v596, %v598
        %600 = vrot.lane.b32.xlu0 %v388, 112
        %v601 = vpop.permute.xlu0 %600
        %602 = vrot.lane.b32.xlu0 %v450, 112
        %v603 = vpop.permute.xlu0 %602
        %604 = vrot.lane.b32.xlu0 %v453, 112
        %v605 = vpop.permute.xlu0 %604
        %v606 = vsel %vm455, %v601, 0
        %v608 = vsel %vm455, %v603, 0
        %v610 = vsel %vm455, %v605, 0
        %612 = vmatpush.xpose.msra.mxu0 0.0
        %613 = vmatpush.xpose.msra.mxu0 0.0
        %614 = vmatpush.xpose.msra.mxu0 0.0
        %615 = vmatpush.xpose.msra.mxu0 0.0
        %616 = vmatpush.xpose.msra.mxu0 0.0
        %617 = vmatpush.xpose.msra.mxu0 0.0
        %618 = vmatpush.xpose.msra.mxu0 0.0
        %619 = vmatpush.xpose.msra.mxu0 0.0
        %620 = vmatpush.xpose.msra.mxu0 0.0
        %621 = vmatpush.xpose.msra.mxu0 0.0
        %622 = vmatpush.xpose.msra.mxu0 0.0
        %623 = vmatpush.xpose.msra.mxu0 0.0
        %624 = vmatpush.xpose.msra.mxu0 0.0
        %625 = vmatpush.xpose.msra.mxu0 0.0
        %626 = vmatpush.xpose.msra.mxu0 %v610
        %627 = vmatpush.xpose.msra.mxu0 %v608
        %628 = vmatmul.f32.gmra.mxu0 %v606
        %v629 = vpop.f32.mrf.mxu0
        %v630 = vadd.f32 0.0, %v629
        %631 = vdwg.mxu0
        %v632 = vmul.f32 %v630, 0.35355338
        %v633 = vsel %vm486, %v632, -inf
        %634 = vmax.xlane.f32.xlu0 %v633
        %v635 = vpop.xlane.xlu0 %634
        %v636 = vsub.f32 %v632, %v635
        %v637 = vmul.f32 %v636, 1.442695
        %v638 = vpow.pop %v637
        %v639 = vsel %vm486, %v638, 0.0
        %640 = vadd.xlane.f32.xlu0 %v639
        %v641 = vpop.xlane.xlu0 %640
        %642 = vrot.lane.b32.xlu0 %v450, 80
        %v643 = vpop.permute.xlu0 %642
        %644 = vrot.lane.b32.xlu0 %v453, 80
        %v645 = vpop.permute.xlu0 %644
        %v649 = vsel %vm486, %v638, 0
        %651 = vmatpush.msra.mxu0 0.0
        %652 = vmatpush.msra.mxu0 0.0
        %653 = vmatpush.msra.mxu0 0.0
        %654 = vmatpush.msra.mxu0 0.0
        %655 = vmatpush.msra.mxu0 0.0
        %656 = vmatpush.msra.mxu0 0.0
        %657 = vmatpush.msra.mxu0 0.0
        %658 = vmatpush.msra.mxu0 0.0
        %659 = vmatpush.msra.mxu0 0.0
        %660 = vmatpush.msra.mxu0 0.0
        %661 = vmatpush.msra.mxu0 0.0
        %662 = vmatpush.msra.mxu0 0.0
        %663 = vmatpush.msra.mxu0 0.0
        %664 = vmatpush.msra.mxu0 0.0
        %665 = vmatpush.msra.mxu0 %v645
        %666 = vmatpush.msra.mxu0 %v643
        %667 = vmatmul.f32.gmra.mxu0 %v649
        %v668 = vpop.f32.mrf.mxu0
        %v669 = vadd.f32 0.0, %v668
        %670 = vdwg.mxu0
        %v671 = vrcp.pop %v641
        %v672 = vmul.f32 %v669, %v671
        %673 = vrot.lane.b32.xlu0 %v388, 104
        %v674 = vpop.permute.xlu0 %673
        %675 = vrot.lane.b32.xlu0 %v450, 104
        %v676 = vpop.permute.xlu0 %675
        %677 = vrot.lane.b32.xlu0 %v453, 104
        %v678 = vpop.permute.xlu0 %677
        %v679 = vsel %vm455, %v674, 0
        %v681 = vsel %vm455, %v676, 0
        %v683 = vsel %vm455, %v678, 0
        %685 = vmatpush.xpose.msra.mxu0 0.0
        %686 = vmatpush.xpose.msra.mxu0 0.0
        %687 = vmatpush.xpose.msra.mxu0 0.0
        %688 = vmatpush.xpose.msra.mxu0 0.0
        %689 = vmatpush.xpose.msra.mxu0 0.0
        %690 = vmatpush.xpose.msra.mxu0 0.0
        %691 = vmatpush.xpose.msra.mxu0 0.0
        %692 = vmatpush.xpose.msra.mxu0 0.0
        %693 = vmatpush.xpose.msra.mxu0 0.0
        %694 = vmatpush.xpose.msra.mxu0 0.0
        %695 = vmatpush.xpose.msra.mxu0 0.0
        %696 = vmatpush.xpose.msra.mxu0 0.0
        %697 = vmatpush.xpose.msra.mxu0 0.0
        %698 = vmatpush.xpose.msra.mxu0 0.0
        %699 = vmatpush.xpose.msra.mxu0 %v683
        %700 = vmatpush.xpose.msra.mxu0 %v681
        %701 = vmatmul.f32.gmra.mxu0 %v679
        %v702 = vpop.f32.mrf.mxu0
        %v703 = vadd.f32 0.0, %v702
        %704 = vdwg.mxu0
        %v705 = vmul.f32 %v703, 0.35355338
        %v706 = vsel %vm486, %v705, -inf
        %707 = vmax.xlane.f32.xlu0 %v706
        %v708 = vpop.xlane.xlu0 %707
        %v709 = vsub.f32 %v705, %v708
        %v710 = vmul.f32 %v709, 1.442695
        %v711 = vpow.pop %v710
        %v712 = vsel %vm486, %v711, 0.0
        %713 = vadd.xlane.f32.xlu0 %v712
        %v714 = vpop.xlane.xlu0 %713
        %715 = vrot.lane.b32.xlu0 %v450, 72
        %v716 = vpop.permute.xlu0 %715
        %717 = vrot.lane.b32.xlu0 %v453, 72
        %v718 = vpop.permute.xlu0 %717
        %v722 = vsel %vm486, %v711, 0
        %724 = vmatpush.msra.mxu0 0.0
        %725 = vmatpush.msra.mxu0 0.0
        %726 = vmatpush.msra.mxu0 0.0
        %727 = vmatpush.msra.mxu0 0.0
        %728 = vmatpush.msra.mxu0 0.0
        %729 = vmatpush.msra.mxu0 0.0
        %730 = vmatpush.msra.mxu0 0.0
        %731 = vmatpush.msra.mxu0 0.0
        %732 = vmatpush.msra.mxu0 0.0
        %733 = vmatpush.msra.mxu0 0.0
        %734 = vmatpush.msra.mxu0 0.0
        %735 = vmatpush.msra.mxu0 0.0
        %736 = vmatpush.msra.mxu0 0.0
        %737 = vmatpush.msra.mxu0 0.0
        %738 = vmatpush.msra.mxu0 %v718
        %739 = vmatpush.msra.mxu0 %v716
        %740 = vmatmul.f32.gmra.mxu0 %v722
        %v741 = vpop.f32.mrf.mxu0
        %v742 = vadd.f32 0.0, %v741
        %743 = vdwg.mxu0
        %v744 = vrcp.pop %v714
        %v745 = vmul.f32 %v742, %v744
        %747 = vrot.lane.b32.xlu0 %v599, 8
        %v748 = vpop.permute.xlu0 %747
        %751 = vrot.lane.b32.xlu0 %v672, 16
        %v752 = vpop.permute.xlu0 %751
        %755 = vrot.lane.b32.xlu0 %v745, 24
        %v756 = vpop.permute.xlu0 %755
        %v758 = vsel %vm455, %v526, %v748
        %v759 = vsel %vm486, %v758, %v752
        %vm760 = vcmask 195584
        %v761 = vsel %vm760, %v759, %v756
        %v762 = vld [vmem:[%s6] sm:$0xff]
        %v763 = vld [vmem:[%s6 + $0x8] sm:$0xff]
        %v764 = vld [vmem:[%s6 + $0x10] sm:$0xff]
        %v765 = vld [vmem:[%s6 + $0x18] sm:$0xff]
        %v766 = vld [vmem:[%s7] sm:$0x1]
        %v768 = vperm.slane %v766, 0
        %v771 = vsel %vm354, %v761, 0
        %v774 = vsel %vm354, %v762, 0
        %v777 = vsel %vm354, %v763, 0
        %v780 = vsel %vm354, %v764, 0
        %v783 = vsel %vm354, %v765, 0
        %785 = vmatpush.xpose.msra.mxu0 0.0
        %786 = vmatpush.xpose.msra.mxu0 0.0
        %787 = vmatpush.xpose.msra.mxu0 0.0
        %788 = vmatpush.xpose.msra.mxu0 0.0
        %789 = vmatpush.xpose.msra.mxu0 0.0
        %790 = vmatpush.xpose.msra.mxu0 0.0
        %791 = vmatpush.xpose.msra.mxu0 0.0
        %792 = vmatpush.xpose.msra.mxu0 0.0
        %793 = vmatpush.xpose.msra.mxu0 0.0
        %794 = vmatpush.xpose.msra.mxu0 0.0
        %795 = vmatpush.xpose.msra.mxu0 0.0
        %796 = vmatpush.xpose.msra.mxu0 0.0
        %797 = vmatpush.xpose.msra.mxu0 %v783
        %798 = vmatpush.xpose.msra.mxu0 %v780
        %799 = vmatpush.xpose.msra.mxu0 %v777
        %800 = vmatpush.xpose.msra.mxu0 %v774
        %801 = vmatmul.f32.gmra.mxu0 %v771
        %v802 = vpop.f32.mrf.mxu0
        %v803 = vadd.f32 %v768, %v802
        %804 = vdwg.mxu0
        %805 = vst.msk [vmem:[%s337] sm:$0xff] %vm354, %v803
        %s806 = sand.u32 %s211, 1
        %s807 = scalar_lea.sflag [#allocation4], %s806
        %s808 = sand.u32 %s211, 1
        %s809 = smul.addr %s808, 8
        %s810 = scalar_lea.vmem [#allocation5], %s809
        // Predicated region
        $region57: #{tpu_custom_call.1} parent=51 // pred_check
          %p811 = pneg %p221
        $region58: #{tpu_custom_call.1} parent=51 // pred_check_branch
          %813 = sbr.rel (%p811) target = $region60
        $region59: #{tpu_custom_call.1} parent=51 // pred_region
          %815 = vsyncadd %s807, 0
          %s816 = smul.addr %s25, 8
          %s817 = scalar_lea.hbm %s8, %s816
          %s819 = sshll.u32 %s810, 4
          %s820 = int_to_ptr.vmem [resolvable:$true] %s819
          %s821 = sshll.u32 %s817, 4
          %s822 = int_to_ptr.hbm [resolvable:$true] %s821
          %824 = dma.vmem_to_hbm [thread:$0]  %s820, 128, %s822, %s807
        $region60: #{tpu_custom_call.1} parent=51 // pred_fallthru
          _
      $region52: #{tpu_custom_call.1} parent=5 // pred_fallthru
        _
      %p825 = scmp.le.s32.totalorder 2, %s20
      // Predicated region
      $region61: #{tpu_custom_call.1} parent=5 // pred_check
        %p826 = pneg %p825
      $region62: #{tpu_custom_call.1} parent=5 // pred_check_branch
        %828 = sbr.rel (%p826) target = $region64
      $region63: #{tpu_custom_call.1} parent=5 // pred_region
        %s829 = ssub.s32 %s20, 2
        // Predicated region
        $region65: #{tpu_custom_call.1} parent=63 // pred_check
          %p830 = pneg %p227
        $region66: #{tpu_custom_call.1} parent=63 // pred_check_branch
          %832 = sbr.rel (%p830) target = $region68
        $region67: #{tpu_custom_call.1} parent=63 // pred_region
          %s833 = sand.u32 %s212, 1
          %s834 = scalar_lea.sflag [#allocation4], %s833
          %s835 = sand.u32 %s212, 1
          %s836 = smul.addr %s835, 8
          %s837 = scalar_lea.vmem [#allocation5], %s836
          %839 = dma.done %s834, 128
        $region68: #{tpu_custom_call.1} parent=63 // pred_fallthru
          _
      $region64: #{tpu_custom_call.1} parent=5 // pred_fallthru
        _
    $region6: #{tpu_custom_call.1} parent=1 // loop_footer
      %s24 = sadd.s32 1, %s20
    $region7: #{tpu_custom_call.1} parent=1 // loop_footer_branch
      %19 = sbr.rel target = $region3
    $region8: #{tpu_custom_call.1} parent=1 // loop_exit
      _
    %840 = vsyncpa [#allocation3], 1
    %s841 = scalar_lea.sflag [#allocation3], 1
    %842 = vsyncpa %s841, 1
    %843 = vsyncpa [#allocation4], 1
    %s844 = scalar_lea.sflag [#allocation4], 1
    %845 = vsyncpa %s844, 1

</llo_original>
